<compile_context>
chip_gen: v6e
topology: v6e:2x2x1
jax: 0.10.0
libtpu: 0.0.40
codegen_flags: <defaults>
</compile_context>

<pallas_src>
import functools

import jax
import jax.numpy as jnp
from jax.experimental import pallas as pl
from jax.experimental.pallas import tpu as pltpu


def _sdpa_kernel(q_ref, k_ref, v_ref, *rest, temperature, has_mask, return_attn,
                 compute_dtype):
    idx = 0
    m_ref = None
    if has_mask:
        m_ref = rest[idx]
        idx += 1
    out_ref = rest[idx]
    idx += 1
    attn_ref = rest[idx] if return_attn else None

    q = q_ref[...]            # (Gb, Tq, Dk)
    k = k_ref[...]            # (Gb, Lk, Dk)
    if compute_dtype is not None:
        q = q.astype(compute_dtype)
        k = k.astype(compute_dtype)

    # scores = (q @ k^T) / temperature, as a batched transposed contraction so K
    # is consumed in its native (Lk, Dk) layout (no XLU transpose).
    scores = jnp.einsum("gqd,gkd->gqk", q, k,
                        preferred_element_type=jnp.float32)     # (Gb, Tq, Lk) f32
    scores = scores * jnp.float32(1.0 / temperature)

    if has_mask:
        m = m_ref[...]                                          # int32, broadcastable
        if m.shape != scores.shape:
            m = jnp.broadcast_to(m, scores.shape)
        # masked_fill_(mask, 1e-9) before softmax, matching the PyTorch source.
        # (Same fill value for both masks => mask1|mask2 merged in the wrapper.)
        scores = jnp.where(m != 0, jnp.float32(1e-9), scores)

    # Numerically-stable softmax along Lk, exact normalization in f32.
    s_max = jnp.max(scores, axis=-1, keepdims=True)
    e = jnp.exp(scores - s_max)
    denom = jnp.sum(e, axis=-1, keepdims=True)
    attn = e / denom

    if return_attn:
        attn_ref[...] = attn.astype(attn_ref.dtype)

    pv_dtype = compute_dtype if compute_dtype is not None else v_ref.dtype
    out = jnp.einsum("gqk,gkd->gqd", attn.astype(pv_dtype),
                     v_ref[...].astype(pv_dtype),
                     preferred_element_type=jnp.float32)        # (Gb, Tq, Dv)
    out_ref[...] = out.astype(out_ref.dtype)


def _vmem_budget_and_limit():
    """Generation-aware VMEM budget (blocks + temporaries) and compiler limit."""
    cap = 64 * 1024 * 1024                      # conservative default (v7x-sized)
    try:
        info = pltpu.get_tpu_info()
        cap = int(getattr(info, "vmem_capacity_bytes", cap))
    except Exception:
        pass
    return int(cap * 0.70), int(cap * 0.85)


def _choose_tiles(G, Lq, Lk, Dk, Dv, in_bytes, out_bytes, mask_block_elems,
                  return_attn, budget):
    def step_bytes(gb, tq_):
        n_q = Lq // tq_
        kv_bufs = 1 if n_q > 1 else 2           # K/V single-buffered when revisited
        b = 2 * gb * tq_ * Dk * in_bytes                        # q (double-buffered)
        b += kv_bufs * gb * Lk * (Dk + Dv) * in_bytes           # k + v (full Lk)
        if mask_block_elems is not None:
            b += 2 * mask_block_elems(gb, tq_) * 4              # int32 merged mask
        b += 2 * gb * tq_ * Dv * out_bytes                      # output
        if return_attn:
            b += 2 * gb * tq_ * Lk * out_bytes                  # attn writeback
        b += 4 * gb * tq_ * Lk * 4          # ~4 f32 score temporaries live at once
        return b

    # q tile along Lq: full when small, else the largest MXU-friendly divisor.
    if Lq <= 512:
        tq = Lq
    else:
        tq = Lq
        for cand in (512, 384, 256, 128):
            if Lq % cand == 0:
                tq = cand
                break
    # Shrink under the VMEM budget, but never below the MXU-width floor of 128.
    tq_floor = min(128, Lq)
    while (step_bytes(1, tq) > budget and tq > tq_floor and tq % 2 == 0
           and tq // 2 >= tq_floor and Lq % (tq // 2) == 0):
        tq //= 2

    # Block several (batch, head) pairs per grid step when they fit, but keep
    # >= 2 groups along the g axis so v7x's two TensorCores split over
    # independent heads (each fetching its K/V once), not Lq tiles of one head.
    divisors = [d for d in range(1, G + 1) if G % d == 0]
    fitting = [d for d in divisors if step_bytes(d, tq) <= budget] or [1]
    pref = [d for d in fitting if G // d >= 2]
    gb = max(pref) if pref else max(fitting)
    return gb, tq


def _prepare_mask(mask1, mask2, B, H, Lq, Lk):
    """OR-merge the two masks (same fill value => equivalent) WITHOUT broadcasting
    to the full (B, H, Lq, Lk).  Broadcast dims stay size-1 and are pinned to
    block index 0 by the mask BlockSpec, so e.g. a (B, 1, 1, Lk) padding mask is
    not replicated H*Lq times through HBM."""
    merged = jnp.logical_or(mask1, mask2)
    if merged.ndim > 4:
        raise ValueError(f"mask rank {merged.ndim} > 4")
    merged = merged.reshape((1,) * (4 - merged.ndim) + merged.shape)
    mb, mh, mq, mk = merged.shape
    for dim, full in ((mb, B), (mh, H), (mq, Lq), (mk, Lk)):
        if dim not in (1, full):
            raise ValueError(f"mask shape {merged.shape} not broadcastable to "
                             f"{(B, H, Lq, Lk)}")
    if mb == 1 and mh == 1:
        g_full = False
        m3 = merged.reshape(1, mq, mk)
    else:
        g_full = True
        merged = jnp.broadcast_to(merged, (B, H, mq, mk))
        m3 = merged.reshape(B * H, mq, mk)
    return m3.astype(jnp.int32), g_full, (mq == Lq), (mk == Lk)


def scaled_dot_product_attention(q, k, v, mask1=None, mask2=None, *, temperature,
                                 return_attn=True, compute_dtype=None):
    """Pallas TPU implementation of ScaledDotProductAttention.forward (eval mode)."""
    B, H, Lq, Dk = q.shape
    _, _, Lk, Dk2 = k.shape
    _, _, _, Dv = v.shape
    assert Dk == Dk2

    G = B * H
    qf = q.reshape(G, Lq, Dk)
    kf = k.reshape(G, Lk, Dk)
    vf = v.reshape(G, Lk, Dv)

    # Mask applied only when BOTH are given -- exactly the PyTorch module's check.
    has_mask = (mask1 is not None) and (mask2 is not None)
    operands = [qf, kf, vf]
    mask_block_elems = None
    if has_mask:
        m3, m_gfull, m_qfull, m_kfull = _prepare_mask(mask1, mask2, B, H, Lq, Lk)
        operands.append(m3)
        mask_block_elems = lambda gb, tq: ((gb if m_gfull else 1)
                                           * (tq if m_qfull else 1)
                                           * (Lk if m_kfull else 1))

    in_bytes = jnp.dtype(q.dtype).itemsize
    out_bytes = in_bytes
    budget, vmem_limit = _vmem_budget_and_limit()
    Gb, Tq = _choose_tiles(G, Lq, Lk, Dk, Dv, in_bytes, out_bytes,
                           mask_block_elems, return_attn, budget)
    n_q = Lq // Tq
    grid = (G // Gb, n_q)

    # K/V blocks only change when the outer g axis advances; single-buffer them
    # when the inner Lq axis has >1 step (halves their VMEM, no overlap lost).
    kv_kwargs = {"pipeline_mode": pl.Buffered(1)} if n_q > 1 else {}

    in_specs = [
        pl.BlockSpec((Gb, Tq, Dk), lambda g, i: (g, i, 0)),                 # q
        pl.BlockSpec((Gb, Lk, Dk), lambda g, i: (g, 0, 0), **kv_kwargs),    # k
        pl.BlockSpec((Gb, Lk, Dv), lambda g, i: (g, 0, 0), **kv_kwargs),    # v
    ]
    if has_mask:
        mg_blk = Gb if m_gfull else 1
        mq_blk = Tq if m_qfull else 1
        mk_blk = Lk if m_kfull else 1
        in_specs.append(pl.BlockSpec(
            (mg_blk, mq_blk, mk_blk),
            lambda g, i: (g if m_gfull else 0, i if m_qfull else 0, 0)))

    out_shape = [jax.ShapeDtypeStruct((G, Lq, Dv), q.dtype)]
    out_specs = [pl.BlockSpec((Gb, Tq, Dv), lambda g, i: (g, i, 0))]
    if return_attn:
        out_shape.append(jax.ShapeDtypeStruct((G, Lq, Lk), q.dtype))
        out_specs.append(pl.BlockSpec((Gb, Tq, Lk), lambda g, i: (g, i, 0)))

    # Two TensorCores (v7x) split over independent (batch, head) groups when
    # possible so each core fetches K/V once; otherwise split over Lq tiles.
    lq_sem = "arbitrary" if (G // Gb) >= 2 else "parallel"

    kernel = functools.partial(_sdpa_kernel, temperature=float(temperature),
                               has_mask=has_mask, return_attn=return_attn,
                               compute_dtype=compute_dtype)

    results = pl.pallas_call(
        kernel,
        out_shape=tuple(out_shape),
        grid=grid,
        in_specs=in_specs,
        out_specs=tuple(out_specs),
        compiler_params=pltpu.CompilerParams(
            dimension_semantics=("parallel", lq_sem),
            vmem_limit_bytes=vmem_limit),
    )(*operands)

    if return_attn:
        out_f, attn_f = results
        return out_f.reshape(B, H, Lq, Dv), attn_f.reshape(B, H, Lq, Lk)
    out_f = results[0] if isinstance(results, (tuple, list)) else results
    return out_f.reshape(B, H, Lq, Dv), None


def _reference(q, k, v, mask1, mask2, temperature):
    prec = jax.lax.Precision.HIGHEST
    scores = jnp.einsum("bhqd,bhkd->bhqk",
                        (q / temperature).astype(jnp.float32),
                        k.astype(jnp.float32), precision=prec)
    if mask1 is not None and mask2 is not None:
        scores = jnp.where(mask1, 1e-9, scores)
        scores = jnp.where(mask2, 1e-9, scores)
    attn = jax.nn.softmax(scores, axis=-1)
    out = jnp.einsum("bhqk,bhkd->bhqd", attn, v.astype(jnp.float32),
                     precision=prec)
    return out.astype(q.dtype), attn.astype(q.dtype)


if __name__ == "__main__":
    B, H, L, D = 2, 2, 8, 32
    temperature = float(D) ** 0.5

    key = jax.random.PRNGKey(0)
    kq, kk, kv, km1, km2 = jax.random.split(key, 5)
    q = jax.random.normal(kq, (B, H, L, D), dtype=jnp.float32)
    k = jax.random.normal(kk, (B, H, L, D), dtype=jnp.float32)
    v = jax.random.normal(kv, (B, H, L, D), dtype=jnp.float32)
    mask1 = jax.random.bernoulli(km1, 0.2, (B, H, L, L))
    mask2 = jax.random.bernoulli(km2, 0.2, (B, H, L, L))

    # The MXU evaluates f32 matmuls with bf16 passes under DEFAULT precision, so
    # kernel-vs-reference differences of up to ~1e-2 are expected; the reference
    # uses HIGHEST precision and the tolerance absorbs the default-precision gap.
    tol = dict(atol=2e-2, rtol=2e-2)

    # Masked path.
    out, attn = scaled_dot_product_attention(q, k, v, mask1, mask2,
                                             temperature=temperature)
    out = jax.block_until_ready(out)
    attn = jax.block_until_ready(attn)
    ref_out, ref_attn = _reference(q, k, v, mask1, mask2, temperature)
    assert jnp.allclose(out, ref_out, **tol)
    assert jnp.allclose(attn, ref_attn, **tol)

    # No-mask path (mask operand is skipped entirely, as in the module).
    out2, attn2 = scaled_dot_product_attention(q, k, v, temperature=temperature)
    out2 = jax.block_until_ready(out2)
    attn2 = jax.block_until_ready(attn2)
    ref_out2, ref_attn2 = _reference(q, k, v, None, None, temperature)
    assert jnp.allclose(out2, ref_out2, **tol)
    assert jnp.allclose(attn2, ref_attn2, **tol)

    # Output-only path with the opt-in bf16 MXU mode (no attn HBM writeback).
    out3, attn3 = scaled_dot_product_attention(
        q, k, v, mask1, mask2, temperature=temperature,
        return_attn=False, compute_dtype=jnp.bfloat16)
    out3 = jax.block_until_ready(out3)
    assert attn3 is None
    assert jnp.allclose(out3, ref_out, atol=6e-2, rtol=6e-2)

    print("KERNEL_OK")
</pallas_src>

<mosaic_0001>
module attributes {stable_mosaic.version = 11 : i64} {
  func.func @_sdpa_kernel(%arg0: i32, %arg1: i32, %arg2: memref<2x8x32xf32, #tpu.memory_space<vmem>>, %arg3: memref<2x8x32xf32, #tpu.memory_space<vmem>>, %arg4: memref<2x8x32xf32, #tpu.memory_space<vmem>>, %arg5: memref<2x8x8xi32, #tpu.memory_space<vmem>>, %arg6: memref<2x8x32xf32, #tpu.memory_space<vmem>>, %arg7: memref<2x8x8xf32, #tpu.memory_space<vmem>>) attributes {dimension_semantics = [#tpu.dimension_semantics<parallel>, #tpu.dimension_semantics<arbitrary>], iteration_bounds = array<i64: 2, 1>, scalar_prefetch = 0 : i64, scratch_operands = 0 : i64, tpu.core_type = #tpu.core_type<tc>, window_params = [{transform_indices = @transform_0, window_bounds = array<i64: 2, 8, 32>}, {transform_indices = @transform_1, window_bounds = array<i64: 2, 8, 32>}, {transform_indices = @transform_2, window_bounds = array<i64: 2, 8, 32>}, {transform_indices = @transform_3, window_bounds = array<i64: 2, 8, 8>}, {transform_indices = @transform_4, window_bounds = array<i64: 2, 8, 32>}, {transform_indices = @transform_5, window_bounds = array<i64: 2, 8, 8>}]} {
    %c0 = arith.constant 0 : index
    %c0_0 = arith.constant 0 : index
    %c0_1 = arith.constant 0 : index
    %0 = vector.load %arg2[%c0, %c0_0, %c0_1] : memref<2x8x32xf32, #tpu.memory_space<vmem>>, vector<2x8x32xf32>
    %c0_2 = arith.constant 0 : index
    %c0_3 = arith.constant 0 : index
    %c0_4 = arith.constant 0 : index
    %1 = vector.load %arg3[%c0_2, %c0_3, %c0_4] : memref<2x8x32xf32, #tpu.memory_space<vmem>>, vector<2x8x32xf32>
    "tpu.trace_start"() <{level = 10 : i32, message = "gqd,gkd->gqk"}> : () -> ()
    %cst = arith.constant dense<0.000000e+00> : vector<2x8x8xf32>
    %2 = tpu.matmul %0, %1, %cst {dimension_numbers = #tpu.dot_dimension_numbers<[2], [2], [1], [1], [0, 0, 0, 1, 1, 1], [0], [0]>} : vector<2x8x32xf32>, vector<2x8x32xf32>, vector<2x8x8xf32> -> vector<2x8x8xf32>
    "tpu.trace_stop"() : () -> ()
    %cst_5 = arith.constant 0.176776692 : f32
    %3 = vector.broadcast %cst_5 : f32 to vector<2x8x8xf32>
    %4 = arith.mulf %2, %3 : vector<2x8x8xf32>
    %c0_6 = arith.constant 0 : index
    %c0_7 = arith.constant 0 : index
    %c0_8 = arith.constant 0 : index
    %5 = vector.load %arg5[%c0_6, %c0_7, %c0_8] : memref<2x8x8xi32, #tpu.memory_space<vmem>>, vector<2x8x8xi32>
    %c0_i32 = arith.constant 0 : i32
    %6 = vector.broadcast %c0_i32 : i32 to vector<2x8x8xi32>
    %7 = arith.cmpi ne, %5, %6 : vector<2x8x8xi32>
    %cst_9 = arith.constant 9.99999971E-10 : f32
    %8 = vector.broadcast %cst_9 : f32 to vector<2x8x8xf32>
    %9 = arith.select %7, %8, %4 : vector<2x8x8xi1>, vector<2x8x8xf32>
    %cst_10 = arith.constant dense<0xFF800000> : vector<2x8xf32>
    %10 = vector.multi_reduction <maximumf>, %9, %cst_10 [2] : vector<2x8x8xf32> to vector<2x8xf32>
    %11 = vector.shape_cast %10 : vector<2x8xf32> to vector<2x8x1xf32>
    %12 = vector.broadcast %11 : vector<2x8x1xf32> to vector<2x8x8xf32>
    %13 = arith.subf %9, %12 : vector<2x8x8xf32>
    %14 = math.exp %13 : vector<2x8x8xf32>
    %cst_11 = arith.constant dense<0.000000e+00> : vector<2x8xf32>
    %15 = vector.multi_reduction <add>, %14, %cst_11 [2] : vector<2x8x8xf32> to vector<2x8xf32>
    %16 = vector.shape_cast %15 : vector<2x8xf32> to vector<2x8x1xf32>
    %17 = vector.broadcast %16 : vector<2x8x1xf32> to vector<2x8x8xf32>
    %18 = arith.divf %14, %17 : vector<2x8x8xf32>
    %c0_12 = arith.constant 0 : index
    %c0_13 = arith.constant 0 : index
    %c0_14 = arith.constant 0 : index
    %19 = vector.load %arg7[%c0_12, %c0_13, %c0_14] : memref<2x8x8xf32, #tpu.memory_space<vmem>>, vector<2x8x8xf32>
    tpu.vector_store %arg7[%c0_12, %c0_13, %c0_14], %18 {strides = array<i32>} : memref<2x8x8xf32, #tpu.memory_space<vmem>>, vector<2x8x8xf32>,
    %c0_15 = arith.constant 0 : index
    %c0_16 = arith.constant 0 : index
    %c0_17 = arith.constant 0 : index
    %20 = vector.load %arg4[%c0_15, %c0_16, %c0_17] : memref<2x8x32xf32, #tpu.memory_space<vmem>>, vector<2x8x32xf32>
    "tpu.trace_start"() <{level = 10 : i32, message = "gqk,gkd->gqd"}> : () -> ()
    %cst_18 = arith.constant dense<0.000000e+00> : vector<2x8x32xf32>
    %21 = tpu.matmul %18, %20, %cst_18 {dimension_numbers = #tpu.dot_dimension_numbers<[2], [1], [1], [2], [0, 0, 0, 1, 1, 2], [0], [0]>} : vector<2x8x8xf32>, vector<2x8x32xf32>, vector<2x8x32xf32> -> vector<2x8x32xf32>
    "tpu.trace_stop"() : () -> ()
    %c0_19 = arith.constant 0 : index
    %c0_20 = arith.constant 0 : index
    %c0_21 = arith.constant 0 : index
    %22 = vector.load %arg6[%c0_19, %c0_20, %c0_21] : memref<2x8x32xf32, #tpu.memory_space<vmem>>, vector<2x8x32xf32>
    tpu.vector_store %arg6[%c0_19, %c0_20, %c0_21], %21 {strides = array<i32>} : memref<2x8x32xf32, #tpu.memory_space<vmem>>, vector<2x8x32xf32>,
    return
  }
  func.func @transform_0(%arg0: i32, %arg1: i32) -> (i32, i32, i32) {
    %c0_i32 = arith.constant 0 : i32
    %c0_i32_0 = arith.constant 0 : i32
    return %arg0, %arg1, %c0_i32 : i32, i32, i32
  }
  func.func @transform_1(%arg0: i32, %arg1: i32) -> (i32, i32, i32) {
    %c0_i32 = arith.constant 0 : i32
    %c0_i32_0 = arith.constant 0 : i32
    %c0_i32_1 = arith.constant 0 : i32
    return %arg0, %c0_i32, %c0_i32_0 : i32, i32, i32
  }
  func.func @transform_2(%arg0: i32, %arg1: i32) -> (i32, i32, i32) {
    %c0_i32 = arith.constant 0 : i32
    %c0_i32_0 = arith.constant 0 : i32
    %c0_i32_1 = arith.constant 0 : i32
    return %arg0, %c0_i32, %c0_i32_0 : i32, i32, i32
  }
  func.func @transform_3(%arg0: i32, %arg1: i32) -> (i32, i32, i32) {
    %c0_i32 = arith.constant 0 : i32
    %c0_i32_0 = arith.constant 0 : i32
    return %arg0, %arg1, %c0_i32 : i32, i32, i32
  }
  func.func @transform_4(%arg0: i32, %arg1: i32) -> (i32, i32, i32) {
    %c0_i32 = arith.constant 0 : i32
    %c0_i32_0 = arith.constant 0 : i32
    return %arg0, %arg1, %c0_i32 : i32, i32, i32
  }
  func.func @transform_5(%arg0: i32, %arg1: i32) -> (i32, i32, i32) {
    %c0_i32 = arith.constant 0 : i32
    %c0_i32_0 = arith.constant 0 : i32
    return %arg0, %arg1, %c0_i32 : i32, i32, i32
  }
}

</mosaic_0001>

<llo_original>
// kernel: tpu_custom_call.1
$region0: #{tpu_custom_call.1}
  #allocation0 [shape = 'u32[]', space=smem, size = 0x4, offset = 0x4, fixed_abs, tag = 'smem constant byte address 0x4 - core index']
  #allocation1 [shape = 'u32[144,128]{1,0:T(1,128)}', space=vmem, size = 0x12000, scoped, tag = 'internal scratch']
  %s0 = inlined_call_operand.hbm [shape: f32[4,8,32], index: 0, kind: input, shape index: {}]
  %s1 = inlined_call_operand.hbm [shape: f32[4,8,32], index: 1, kind: input, shape index: {}]
  %s2 = inlined_call_operand.hbm [shape: f32[4,8,32], index: 2, kind: input, shape index: {}]
  %s3 = inlined_call_operand.hbm [shape: s32[4,8,8], index: 3, kind: input, shape index: {}]
  %s4 = inlined_call_operand.hbm [shape: f32[4,8,32], index: 4, kind: output, shape index: {0}]
  %s5 = inlined_call_operand.hbm [shape: f32[4,8,8], index: 5, kind: output, shape index: {1}]
  %6 = xla_tuple %s4, %s5
  %s7 = sld [smem:[#allocation0]]
  $region73: #{tpu_custom_call.1} parent=0
    _
  %s9 = ssub.s32 1, %s7
  %s10 = scalar_select 0, %s9, %s7
  $region1: #{tpu_custom_call.1} parent=0
    #allocation2 [shape = 'u8[16384]{0}', space=vmem, size = 0x4000, scoped, tag = 'input window, operand 0']
    #allocation3 [shape = 's32[2]{0}', space=sflag, size = 0x8, scoped, tag = 'scoped memory for tpu_custom_call.1']
    #allocation4 [shape = 's32[2]{0}', space=sflag, size = 0x8, scoped, tag = 'scoped memory for tpu_custom_call.1']
    #allocation5 [shape = 'u8[16384]{0}', space=vmem, size = 0x4000, scoped, tag = 'input window, operand 1']
    #allocation6 [shape = 's32[2]{0}', space=sflag, size = 0x8, scoped, tag = 'scoped memory for tpu_custom_call.1']
    #allocation7 [shape = 'u8[16384]{0}', space=vmem, size = 0x4000, scoped, tag = 'input window, operand 2']
    #allocation8 [shape = 'u8[16384]{0}', space=vmem, size = 0x4000, scoped, tag = 'input window, operand 3']
    #allocation9 [shape = 's32[2]{0}', space=sflag, size = 0x8, scoped, tag = 'scoped memory for tpu_custom_call.1']
    #allocation10 [shape = 'u8[16384]{0}', space=vmem, size = 0x4000, scoped, tag = 'output window, operand 0']
    #allocation11 [shape = 'u8[16384]{0}', space=vmem, size = 0x4000, scoped, tag = 'output window, operand 1']
    #allocation12 [shape = 's32[2]{0}', space=sflag, size = 0x8, scoped, tag = 'scoped memory for tpu_custom_call.1']
    %11 = vsyncpa [#allocation3], 0
    %s12 = scalar_lea.sflag [#allocation3], 1
    %13 = vsyncpa %s12, 0
    %14 = vsyncpa [#allocation6], 0
    %s15 = scalar_lea.sflag [#allocation6], 1
    %16 = vsyncpa %s15, 0
    %17 = vsyncpa [#allocation9], 0
    %s18 = scalar_lea.sflag [#allocation9], 1
    %19 = vsyncpa %s18, 0
    %20 = vsyncpa [#allocation4], 0
    %s21 = scalar_lea.sflag [#allocation4], 1
    %22 = vsyncpa %s21, 0
    %23 = vsyncpa [#allocation12], 0
    %s24 = scalar_lea.sflag [#allocation12], 1
    %25 = vsyncpa %s24, 0
    loop: start=0, step=1, limit=4
    $region2: #{tpu_custom_call.1} parent=1 // loop_pre_header
      _
    $region3: #{tpu_custom_call.1} parent=1 // loop_header
      %s27 = sphi 0, %s31
      %p28 = scmp.ge.s32.totalorder %s27, 4
      %s34 = sphi 0, %s46
      %s35 = sphi 0, %s42
      %s36 = sphi 0, %s34
      %s37 = sphi 0, %s35
      %s38 = sphi 0, %s36
      %s39 = sphi 0, %s37
      %s51 = sphi 0, %s53
      %s54 = sphi 0, %s51
      %s55 = sphi 0, %s54
      %s71 = sphi 0, %s55
      %s77 = sphi 0, %s79
      %s80 = sphi 0, %s77
      %s81 = sphi 0, %s80
      %s97 = sphi 0, %s81
      %s103 = sphi 0, %s105
      %s106 = sphi 0, %s103
      %s107 = sphi 0, %s106
      %s123 = sphi 0, %s107
      %s131 = sphi 0, %s133
      %s134 = sphi 0, %s131
      %s135 = sphi 0, %s134
      %s151 = sphi 0, %s135
      %s159 = sphi 0, %s161
      %s162 = sphi 0, %s159
      %s163 = sphi 0, %s162
      %s179 = sphi 0, %s163
      %s187 = sphi 0, %s189
      %s190 = sphi 0, %s187
      %s191 = sphi 0, %s190
      %s207 = sphi 0, %s191
    $region4: #{tpu_custom_call.1} parent=1 // loop_header_branch
      %30 = sbr.rel (%p28) target = $region8
    $region5: #{tpu_custom_call.1} parent=1 // loop_body
      %s32 = ssub.s32 %s27, 1
      %s33 = ssub.s32 %s27, 2
      %s40 = sadd.s32 1, %s35
      %p41 = scmp.ge.s32.totalorder %s40, 1
      %s42 = scalar_select %p41, 0, %s40
      %s43 = sadd.s32 1, %s34
      %s44 = scalar_select %p41, %s43, %s34
      %p45 = scmp.ge.s32.totalorder %s44, 2
      %s46 = scalar_select %p45, 0, %s44
      %s47 = ssub.s32 %s34, %s46
      %s48 = ssub.s32 %s35, %s42
      %s49 = sor.u32 %s47, %s48
      %p50 = scmp.eq.s32.totalorder %s49, 0
      %s52 = sadd.s32 %s51, 1
      %s53 = scalar_select %p50, %s51, %s52
      %p56 = pneg %p50
      %p57 = scmp.eq.s32.totalorder %s27, 1
      %p58 = por %p56, %p57
      %p59 = scmp.ne.s32.totalorder %s51, %s54
      %p60 = scmp.eq.s32.totalorder %s27, 0
      %p61 = por %p59, %p60
      %p62 = scmp.ne.s32.totalorder %s51, %s54
      %p63 = scmp.eq.s32.totalorder %s32, 1
      %p64 = por %p62, %p63
      %p65 = scmp.ne.s32.totalorder %s54, %s55
      %p66 = scmp.eq.s32.totalorder %s32, 0
      %p67 = por %p65, %p66
      %p68 = scmp.ne.s32.totalorder %s54, %s55
      %p69 = scmp.eq.s32.totalorder %s33, 1
      %p70 = por %p68, %p69
      %p72 = scmp.ne.s32.totalorder %s55, %s71
      %p73 = scmp.eq.s32.totalorder %s33, 0
      %p74 = por %p72, %p73
      %s75 = ssub.s32 %s34, %s46
      %p76 = scmp.eq.s32.totalorder %s75, 0
      %s78 = sadd.s32 %s77, 1
      %s79 = scalar_select %p76, %s77, %s78
      %p82 = pneg %p76
      %p83 = scmp.eq.s32.totalorder %s27, 1
      %p84 = por %p82, %p83
      %p85 = scmp.ne.s32.totalorder %s77, %s80
      %p86 = scmp.eq.s32.totalorder %s27, 0
      %p87 = por %p85, %p86
      %p88 = scmp.ne.s32.totalorder %s77, %s80
      %p89 = scmp.eq.s32.totalorder %s32, 1
      %p90 = por %p88, %p89
      %p91 = scmp.ne.s32.totalorder %s80, %s81
      %p92 = scmp.eq.s32.totalorder %s32, 0
      %p93 = por %p91, %p92
      %p94 = scmp.ne.s32.totalorder %s80, %s81
      %p95 = scmp.eq.s32.totalorder %s33, 1
      %p96 = por %p94, %p95
      %p98 = scmp.ne.s32.totalorder %s81, %s97
      %p99 = scmp.eq.s32.totalorder %s33, 0
      %p100 = por %p98, %p99
      %s101 = ssub.s32 %s34, %s46
      %p102 = scmp.eq.s32.totalorder %s101, 0
      %s104 = sadd.s32 %s103, 1
      %s105 = scalar_select %p102, %s103, %s104
      %p108 = pneg %p102
      %p109 = scmp.eq.s32.totalorder %s27, 1
      %p110 = por %p108, %p109
      %p111 = scmp.ne.s32.totalorder %s103, %s106
      %p112 = scmp.eq.s32.totalorder %s27, 0
      %p113 = por %p111, %p112
      %p114 = scmp.ne.s32.totalorder %s103, %s106
      %p115 = scmp.eq.s32.totalorder %s32, 1
      %p116 = por %p114, %p115
      %p117 = scmp.ne.s32.totalorder %s106, %s107
      %p118 = scmp.eq.s32.totalorder %s32, 0
      %p119 = por %p117, %p118
      %p120 = scmp.ne.s32.totalorder %s106, %s107
      %p121 = scmp.eq.s32.totalorder %s33, 1
      %p122 = por %p120, %p121
      %p124 = scmp.ne.s32.totalorder %s107, %s123
      %p125 = scmp.eq.s32.totalorder %s33, 0
      %p126 = por %p124, %p125
      %s127 = ssub.s32 %s34, %s46
      %s128 = ssub.s32 %s35, %s42
      %s129 = sor.u32 %s127, %s128
      %p130 = scmp.eq.s32.totalorder %s129, 0
      %s132 = sadd.s32 %s131, 1
      %s133 = scalar_select %p130, %s131, %s132
      %p136 = pneg %p130
      %p137 = scmp.eq.s32.totalorder %s27, 1
      %p138 = por %p136, %p137
      %p139 = scmp.ne.s32.totalorder %s131, %s134
      %p140 = scmp.eq.s32.totalorder %s27, 0
      %p141 = por %p139, %p140
      %p142 = scmp.ne.s32.totalorder %s131, %s134
      %p143 = scmp.eq.s32.totalorder %s32, 1
      %p144 = por %p142, %p143
      %p145 = scmp.ne.s32.totalorder %s134, %s135
      %p146 = scmp.eq.s32.totalorder %s32, 0
      %p147 = por %p145, %p146
      %p148 = scmp.ne.s32.totalorder %s134, %s135
      %p149 = scmp.eq.s32.totalorder %s33, 1
      %p150 = por %p148, %p149
      %p152 = scmp.ne.s32.totalorder %s135, %s151
      %p153 = scmp.eq.s32.totalorder %s33, 0
      %p154 = por %p152, %p153
      %s155 = ssub.s32 %s34, %s46
      %s156 = ssub.s32 %s35, %s42
      %s157 = sor.u32 %s155, %s156
      %p158 = scmp.eq.s32.totalorder %s157, 0
      %s160 = sadd.s32 %s159, 1
      %s161 = scalar_select %p158, %s159, %s160
      %p164 = pneg %p158
      %p165 = scmp.eq.s32.totalorder %s27, 1
      %p166 = por %p164, %p165
      %p167 = scmp.ne.s32.totalorder %s159, %s162
      %p168 = scmp.eq.s32.totalorder %s27, 0
      %p169 = por %p167, %p168
      %p170 = scmp.ne.s32.totalorder %s159, %s162
      %p171 = scmp.eq.s32.totalorder %s32, 1
      %p172 = por %p170, %p171
      %p173 = scmp.ne.s32.totalorder %s162, %s163
      %p174 = scmp.eq.s32.totalorder %s32, 0
      %p175 = por %p173, %p174
      %p176 = scmp.ne.s32.totalorder %s162, %s163
      %p177 = scmp.eq.s32.totalorder %s33, 1
      %p178 = por %p176, %p177
      %p180 = scmp.ne.s32.totalorder %s163, %s179
      %p181 = scmp.eq.s32.totalorder %s33, 0
      %p182 = por %p180, %p181
      %s183 = ssub.s32 %s34, %s46
      %s184 = ssub.s32 %s35, %s42
      %s185 = sor.u32 %s183, %s184
      %p186 = scmp.eq.s32.totalorder %s185, 0
      %s188 = sadd.s32 %s187, 1
      %s189 = scalar_select %p186, %s187, %s188
      %p192 = pneg %p186
      %p193 = scmp.eq.s32.totalorder %s27, 1
      %p194 = por %p192, %p193
      %p195 = scmp.ne.s32.totalorder %s187, %s190
      %p196 = scmp.eq.s32.totalorder %s27, 0
      %p197 = por %p195, %p196
      %p198 = scmp.ne.s32.totalorder %s187, %s190
      %p199 = scmp.eq.s32.totalorder %s32, 1
      %p200 = por %p198, %p199
      %p201 = scmp.ne.s32.totalorder %s190, %s191
      %p202 = scmp.eq.s32.totalorder %s32, 0
      %p203 = por %p201, %p202
      %p204 = scmp.ne.s32.totalorder %s190, %s191
      %p205 = scmp.eq.s32.totalorder %s33, 1
      %p206 = por %p204, %p205
      %p208 = scmp.ne.s32.totalorder %s191, %s207
      %p209 = scmp.eq.s32.totalorder %s33, 0
      %p210 = por %p208, %p209
      %p211 = scmp.le.s32.totalorder 1, %s27
      %p212 = scmp.lt.s32.totalorder %s27, 3
      %p213 = pnand %p211, %p212
      %p214 = pneg %p213
      // Predicated region
      $region9: #{tpu_custom_call.1} parent=5 // pred_check
        _
      $region10: #{tpu_custom_call.1} parent=5 // pred_check_branch
        %216 = sbr.rel (%p213) target = $region12
      $region11: #{tpu_custom_call.1} parent=5 // pred_region
        %s217 = ssub.s32 %s27, 1
      $region12: #{tpu_custom_call.1} parent=5 // pred_fallthru
        _
      %p218 = scmp.lt.s32.totalorder %s27, 2
      // Predicated region
      $region13: #{tpu_custom_call.1} parent=5 // pred_check
        %p219 = pneg %p218
      $region14: #{tpu_custom_call.1} parent=5 // pred_check_branch
        %221 = sbr.rel (%p219) target = $region16
      $region15: #{tpu_custom_call.1} parent=5 // pred_region
        // Predicated region
        $region17: #{tpu_custom_call.1} parent=15 // pred_check
          %p222 = pneg %p61
        $region18: #{tpu_custom_call.1} parent=15 // pred_check_branch
          %224 = sbr.rel (%p222) target = $region20
        $region19: #{tpu_custom_call.1} parent=15 // pred_region
          %s225 = sand.u32 %s51, 1
          %s226 = scalar_lea.sflag [#allocation3], %s225
          %s227 = sand.u32 %s51, 1
          %s228 = smul.addr %s227, 16
          %s229 = scalar_lea.vmem [#allocation2], %s228
          %s230 = smul.u32 2, %s34
          %s232 = ssub.s32 256, 256
          %233 = vsyncadd %s226, %s232
          %s234 = sadd.s32 %s35, %s230
          %s235 = smul.addr %s234, 128
          %s236 = scalar_lea.hbm %s0, %s235
          %s237 = sshll.u32 %s229, 4
          %s238 = int_to_ptr.vmem [resolvable:$true] %s237
          %243 = dma.hbm_to_vmem [thread:$0]  %s236, 256, %s238, %s226, 128, 128, 8
        $region20: #{tpu_custom_call.1} parent=15 // pred_fallthru
          _
        // Predicated region
        $region21: #{tpu_custom_call.1} parent=15 // pred_check
          %p244 = pneg %p87
        $region22: #{tpu_custom_call.1} parent=15 // pred_check_branch
          %246 = sbr.rel (%p244) target = $region24
        $region23: #{tpu_custom_call.1} parent=15 // pred_region
          %s247 = sand.u32 %s27, 1
          %s248 = scalar_lea.sflag [#allocation6], %s247
          %s249 = sand.u32 %s77, 1
          %s250 = smul.addr %s249, 16
          %s251 = scalar_lea.vmem [#allocation5], %s250
          %s252 = smul.u32 2, %s34
          %s254 = ssub.s32 256, 256
          %255 = vsyncadd %s248, %s254
          %s256 = smul.addr %s252, 128
          %s257 = scalar_lea.hbm %s1, %s256
          %s258 = sshll.u32 %s251, 4
          %s259 = int_to_ptr.vmem [resolvable:$true] %s258
          %264 = dma.hbm_to_vmem [thread:$0]  %s257, 256, %s259, %s248, 128, 128, 8
        $region24: #{tpu_custom_call.1} parent=15 // pred_fallthru
          _
        // Predicated region
        $region25: #{tpu_custom_call.1} parent=15 // pred_check
          %p265 = pneg %p113
        $region26: #{tpu_custom_call.1} parent=15 // pred_check_branch
          %267 = sbr.rel (%p265) target = $region28
        $region27: #{tpu_custom_call.1} parent=15 // pred_region
          %s268 = sand.u32 %s27, 1
          %s269 = scalar_lea.sflag [#allocation6], %s268
          %s270 = sand.u32 %s103, 1
          %s271 = smul.addr %s270, 16
          %s272 = scalar_lea.vmem [#allocation7], %s271
          %s273 = smul.u32 2, %s34
          %s275 = ssub.s32 256, 256
          %276 = vsyncadd %s269, %s275
          %s277 = smul.addr %s273, 128
          %s278 = scalar_lea.hbm %s2, %s277
          %s279 = sshll.u32 %s272, 4
          %s280 = int_to_ptr.vmem [resolvable:$true] %s279
          %285 = dma.hbm_to_vmem [thread:$0]  %s278, 256, %s280, %s269, 128, 128, 8
        $region28: #{tpu_custom_call.1} parent=15 // pred_fallthru
          _
        // Predicated region
        $region29: #{tpu_custom_call.1} parent=15 // pred_check
          %p286 = pneg %p141
        $region30: #{tpu_custom_call.1} parent=15 // pred_check_branch
          %288 = sbr.rel (%p286) target = $region32
        $region31: #{tpu_custom_call.1} parent=15 // pred_region
          %s289 = sand.u32 %s131, 1
          %s290 = scalar_lea.sflag [#allocation9], %s289
          %s291 = sand.u32 %s131, 1
          %s292 = smul.addr %s291, 16
          %s293 = scalar_lea.vmem [#allocation8], %s292
          %s294 = smul.u32 2, %s34
          %s296 = ssub.s32 256, 256
          %297 = vsyncadd %s290, %s296
          %s298 = sadd.s32 %s35, %s294
          %s299 = smul.addr %s298, 128
          %s300 = scalar_lea.hbm %s3, %s299
          %s301 = sshll.u32 %s293, 4
          %s302 = int_to_ptr.vmem [resolvable:$true] %s301
          %307 = dma.hbm_to_vmem [thread:$0]  %s300, 256, %s302, %s290, 128, 128, 8
        $region32: #{tpu_custom_call.1} parent=15 // pred_fallthru
          _
      $region16: #{tpu_custom_call.1} parent=5 // pred_fallthru
        _
      %p308 = scmp.le.s32.totalorder 1, %s27
      %p309 = scmp.lt.s32.totalorder %s27, 3
      %p310 = pnand %p308, %p309
      %p311 = pneg %p310
      // Predicated region
      $region33: #{tpu_custom_call.1} parent=5 // pred_check
        _
      $region34: #{tpu_custom_call.1} parent=5 // pred_check_branch
        %313 = sbr.rel (%p310) target = $region36
      $region35: #{tpu_custom_call.1} parent=5 // pred_region
        %s314 = ssub.s32 %s27, 1
        %s315 = sand.u32 %s54, 1
        %s316 = scalar_lea.sflag [#allocation3], %s315
        %s317 = sand.u32 %s54, 1
        %s318 = smul.addr %s317, 16
        %s319 = scalar_lea.vmem [#allocation2], %s318
        // Predicated region
        $region37: #{tpu_custom_call.1} parent=35 // pred_check
          %p320 = pneg %p67
        $region38: #{tpu_custom_call.1} parent=35 // pred_check_branch
          %322 = sbr.rel (%p320) target = $region40
        $region39: #{tpu_custom_call.1} parent=35 // pred_region
          %323 = dma.done %s316, 256
        $region40: #{tpu_custom_call.1} parent=35 // pred_fallthru
          _
        %s324 = sand.u32 %s32, 1
        %s325 = scalar_lea.sflag [#allocation6], %s324
        %s326 = sand.u32 %s80, 1
        %s327 = smul.addr %s326, 16
        %s328 = scalar_lea.vmem [#allocation5], %s327
        // Predicated region
        $region41: #{tpu_custom_call.1} parent=35 // pred_check
          %p329 = pneg %p93
        $region42: #{tpu_custom_call.1} parent=35 // pred_check_branch
          %331 = sbr.rel (%p329) target = $region44
        $region43: #{tpu_custom_call.1} parent=35 // pred_region
          %332 = dma.done %s325, 256
        $region44: #{tpu_custom_call.1} parent=35 // pred_fallthru
          _
        %s333 = sand.u32 %s32, 1
        %s334 = scalar_lea.sflag [#allocation6], %s333
        %s335 = sand.u32 %s106, 1
        %s336 = smul.addr %s335, 16
        %s337 = scalar_lea.vmem [#allocation7], %s336
        // Predicated region
        $region45: #{tpu_custom_call.1} parent=35 // pred_check
          %p338 = pneg %p119
        $region46: #{tpu_custom_call.1} parent=35 // pred_check_branch
          %340 = sbr.rel (%p338) target = $region48
        $region47: #{tpu_custom_call.1} parent=35 // pred_region
          %341 = dma.done %s334, 256
        $region48: #{tpu_custom_call.1} parent=35 // pred_fallthru
          _
        %s342 = sand.u32 %s134, 1
        %s343 = scalar_lea.sflag [#allocation9], %s342
        %s344 = sand.u32 %s134, 1
        %s345 = smul.addr %s344, 16
        %s346 = scalar_lea.vmem [#allocation8], %s345
        // Predicated region
        $region49: #{tpu_custom_call.1} parent=35 // pred_check
          %p347 = pneg %p147
        $region50: #{tpu_custom_call.1} parent=35 // pred_check_branch
          %349 = sbr.rel (%p347) target = $region52
        $region51: #{tpu_custom_call.1} parent=35 // pred_region
          %350 = dma.done %s343, 256
        $region52: #{tpu_custom_call.1} parent=35 // pred_fallthru
          _
        %s351 = sand.u32 %s54, 1
        %s352 = scalar_lea.sflag [#allocation3], %s351
        %s353 = sand.u32 %s54, 1
        %s354 = smul.addr %s353, 16
        %s355 = scalar_lea.vmem [#allocation2], %s354
        %p356 = pneg %p67
        %p357 = pneg %p64
        %s358 = sand.u32 %s32, 1
        %s359 = scalar_lea.sflag [#allocation6], %s358
        %s360 = sand.u32 %s80, 1
        %s361 = smul.addr %s360, 16
        %s362 = scalar_lea.vmem [#allocation5], %s361
        %p363 = pneg %p93
        %p364 = pneg %p90
        %s365 = sand.u32 %s32, 1
        %s366 = scalar_lea.sflag [#allocation6], %s365
        %s367 = sand.u32 %s106, 1
        %s368 = smul.addr %s367, 16
        %s369 = scalar_lea.vmem [#allocation7], %s368
        %p370 = pneg %p119
        %p371 = pneg %p116
        %s372 = sand.u32 %s134, 1
        %s373 = scalar_lea.sflag [#allocation9], %s372
        %s374 = sand.u32 %s134, 1
        %s375 = smul.addr %s374, 16
        %s376 = scalar_lea.vmem [#allocation8], %s375
        %p377 = pneg %p147
        %p378 = pneg %p144
        %p379 = pneg %p175
        %p380 = pneg %p172
        %s381 = sand.u32 %s162, 1
        %s382 = scalar_lea.sflag [#allocation4], %s381
        %s383 = sand.u32 %s162, 1
        %s384 = smul.addr %s383, 16
        %s385 = scalar_lea.vmem [#allocation10], %s384
        %p386 = pneg %p203
        %p387 = pneg %p200
        %s388 = sand.u32 %s190, 1
        %s389 = scalar_lea.sflag [#allocation12], %s388
        %s390 = sand.u32 %s190, 1
        %s391 = smul.addr %s390, 16
        %s392 = scalar_lea.vmem [#allocation11], %s391
        %s393 = smul.u32 2, %s36
        %s394 = smul.u32 2, %s36
        %s395 = smul.u32 2, %s36
        %s396 = smul.u32 2, %s36
        %s397 = smul.u32 2, %s36
        %s398 = smul.u32 2, %s36
        %v399 = vld [vmem:[%s319] sm:$0xff]
        %v400 = vld [vmem:[%s319 + $0x8] sm:$0xff]
        %v401 = vld [vmem:[%s328] sm:$0xff]
        %v402 = vld [vmem:[%s328 + $0x8] sm:$0xff]
        %vm403 = vcmask 261120
        %v405 = vsel %vm403, %v399, 0
        %v408 = vsel %vm403, %v401, 0
        %410 = vmatprep.subr.mxu0 0.0
        %411 = vmatpush1.xpose.msra.mxu0 0.0
        %412 = vmatprep.subr.mxu0 0.0
        %413 = vmatpush1.xpose.msra.mxu0 0.0
        %414 = vmatprep.subr.mxu0 0.0
        %415 = vmatpush1.xpose.msra.mxu0 0.0
        %416 = vmatprep.subr.mxu0 0.0
        %417 = vmatpush1.xpose.msra.mxu0 0.0
        %418 = vmatprep.subr.mxu0 0.0
        %419 = vmatpush1.xpose.msra.mxu0 0.0
        %420 = vmatprep.subr.mxu0 0.0
        %421 = vmatpush1.xpose.msra.mxu0 0.0
        %422 = vmatprep.subr.mxu0 0.0
        %423 = vmatpush1.xpose.msra.mxu0 0.0
        %424 = vmatprep.subr.mxu0 0.0
        %425 = vmatpush1.xpose.msra.mxu0 0.0
        %426 = vmatprep.subr.mxu0 0.0
        %427 = vmatpush1.xpose.msra.mxu0 0.0
        %428 = vmatprep.subr.mxu0 0.0
        %429 = vmatpush1.xpose.msra.mxu0 0.0
        %430 = vmatprep.subr.mxu0 0.0
        %431 = vmatpush1.xpose.msra.mxu0 0.0
        %432 = vmatprep.subr.mxu0 0.0
        %433 = vmatpush1.xpose.msra.mxu0 0.0
        %434 = vmatprep.subr.mxu0 0.0
        %435 = vmatpush1.xpose.msra.mxu0 0.0
        %436 = vmatprep.subr.mxu0 0.0
        %437 = vmatpush1.xpose.msra.mxu0 0.0
        %438 = vmatprep.subr.mxu0 0.0
        %439 = vmatpush1.xpose.msra.mxu0 0.0
        %440 = vmatprep.subr.mxu0 0.0
        %441 = vmatpush1.xpose.msra.mxu0 %v408
        %442 = vmatprep.subr.mxu0 0.0
        %443 = vmatpush2.xpose.msra.mxu0 0.0
        %444 = vmatprep.subr.mxu0 0.0
        %445 = vmatpush2.xpose.msra.mxu0 0.0
        %446 = vmatprep.subr.mxu0 0.0
        %447 = vmatpush2.xpose.msra.mxu0 0.0
        %448 = vmatprep.subr.mxu0 0.0
        %449 = vmatpush2.xpose.msra.mxu0 0.0
        %450 = vmatprep.subr.mxu0 0.0
        %451 = vmatpush2.xpose.msra.mxu0 0.0
        %452 = vmatprep.subr.mxu0 0.0
        %453 = vmatpush2.xpose.msra.mxu0 0.0
        %454 = vmatprep.subr.mxu0 0.0
        %455 = vmatpush2.xpose.msra.mxu0 0.0
        %456 = vmatprep.subr.mxu0 0.0
        %457 = vmatpush2.xpose.msra.mxu0 0.0
        %458 = vmatprep.subr.mxu0 0.0
        %459 = vmatpush2.xpose.msra.mxu0 0.0
        %460 = vmatprep.subr.mxu0 0.0
        %461 = vmatpush2.xpose.msra.mxu0 0.0
        %462 = vmatprep.subr.mxu0 0.0
        %463 = vmatpush2.xpose.msra.mxu0 0.0
        %464 = vmatprep.subr.mxu0 0.0
        %465 = vmatpush2.xpose.msra.mxu0 0.0
        %466 = vmatprep.subr.mxu0 0.0
        %467 = vmatpush2.xpose.msra.mxu0 0.0
        %468 = vmatprep.subr.mxu0 0.0
        %469 = vmatpush2.xpose.msra.mxu0 0.0
        %470 = vmatprep.subr.mxu0 0.0
        %471 = vmatpush2.xpose.msra.mxu0 0.0
        %472 = vmatprep.subr.mxu0 0.0
        %473 = vmatpush2.xpose.msra.mxu0 0.0
        %474 = vmatprep.mubr.f32.mxu0 0.0
        %475 = vmatmul.mubr.f32.gmra.mxu0 %v405
        %v476 = vpop.f32.mrf.mxu0
        %v477 = vadd.f32 0.0, %v476
        %v478 = vpop.f32.mrf.mxu0
        %479 = vdwg.mxu0
        %v481 = vsel %vm403, %v400, 0
        %v484 = vsel %vm403, %v402, 0
        %486 = vmatprep.subr.mxu0 0.0
        %487 = vmatpush1.xpose.msra.mxu0 0.0
        %488 = vmatprep.subr.mxu0 0.0
        %489 = vmatpush1.xpose.msra.mxu0 0.0
        %490 = vmatprep.subr.mxu0 0.0
        %491 = vmatpush1.xpose.msra.mxu0 0.0
        %492 = vmatprep.subr.mxu0 0.0
        %493 = vmatpush1.xpose.msra.mxu0 0.0
        %494 = vmatprep.subr.mxu0 0.0
        %495 = vmatpush1.xpose.msra.mxu0 0.0
        %496 = vmatprep.subr.mxu0 0.0
        %497 = vmatpush1.xpose.msra.mxu0 0.0
        %498 = vmatprep.subr.mxu0 0.0
        %499 = vmatpush1.xpose.msra.mxu0 0.0
        %500 = vmatprep.subr.mxu0 0.0
        %501 = vmatpush1.xpose.msra.mxu0 0.0
        %502 = vmatprep.subr.mxu0 0.0
        %503 = vmatpush1.xpose.msra.mxu0 0.0
        %504 = vmatprep.subr.mxu0 0.0
        %505 = vmatpush1.xpose.msra.mxu0 0.0
        %506 = vmatprep.subr.mxu0 0.0
        %507 = vmatpush1.xpose.msra.mxu0 0.0
        %508 = vmatprep.subr.mxu0 0.0
        %509 = vmatpush1.xpose.msra.mxu0 0.0
        %510 = vmatprep.subr.mxu0 0.0
        %511 = vmatpush1.xpose.msra.mxu0 0.0
        %512 = vmatprep.subr.mxu0 0.0
        %513 = vmatpush1.xpose.msra.mxu0 0.0
        %514 = vmatprep.subr.mxu0 0.0
        %515 = vmatpush1.xpose.msra.mxu0 0.0
        %516 = vmatprep.subr.mxu0 0.0
        %517 = vmatpush1.xpose.msra.mxu0 %v484
        %518 = vmatprep.subr.mxu0 0.0
        %519 = vmatpush2.xpose.msra.mxu0 0.0
        %520 = vmatprep.subr.mxu0 0.0
        %521 = vmatpush2.xpose.msra.mxu0 0.0
        %522 = vmatprep.subr.mxu0 0.0
        %523 = vmatpush2.xpose.msra.mxu0 0.0
        %524 = vmatprep.subr.mxu0 0.0
        %525 = vmatpush2.xpose.msra.mxu0 0.0
        %526 = vmatprep.subr.mxu0 0.0
        %527 = vmatpush2.xpose.msra.mxu0 0.0
        %528 = vmatprep.subr.mxu0 0.0
        %529 = vmatpush2.xpose.msra.mxu0 0.0
        %530 = vmatprep.subr.mxu0 0.0
        %531 = vmatpush2.xpose.msra.mxu0 0.0
        %532 = vmatprep.subr.mxu0 0.0
        %533 = vmatpush2.xpose.msra.mxu0 0.0
        %534 = vmatprep.subr.mxu0 0.0
        %535 = vmatpush2.xpose.msra.mxu0 0.0
        %536 = vmatprep.subr.mxu0 0.0
        %537 = vmatpush2.xpose.msra.mxu0 0.0
        %538 = vmatprep.subr.mxu0 0.0
        %539 = vmatpush2.xpose.msra.mxu0 0.0
        %540 = vmatprep.subr.mxu0 0.0
        %541 = vmatpush2.xpose.msra.mxu0 0.0
        %542 = vmatprep.subr.mxu0 0.0
        %543 = vmatpush2.xpose.msra.mxu0 0.0
        %544 = vmatprep.subr.mxu0 0.0
        %545 = vmatpush2.xpose.msra.mxu0 0.0
        %546 = vmatprep.subr.mxu0 0.0
        %547 = vmatpush2.xpose.msra.mxu0 0.0
        %548 = vmatprep.subr.mxu0 0.0
        %549 = vmatpush2.xpose.msra.mxu0 0.0
        %550 = vmatprep.mubr.f32.mxu0 0.0
        %551 = vmatmul.mubr.f32.gmra.mxu0 %v481
        %v552 = vpop.f32.mrf.mxu0
        %v553 = vadd.f32 0.0, %v552
        %v554 = vpop.f32.mrf.mxu0
        %555 = vdwg.mxu0
        %v556 = vmul.f32 %v477, 0.17677669
        %v557 = vmul.f32 %v553, 0.17677669
        %v558 = vld [vmem:[%s346] sm:$0xff]
        %v559 = vld [vmem:[%s346 + $0x8] sm:$0xff]
        %vm560 = vcmp.ne.s32.totalorder %v558, 0
        %vm561 = vcmp.ne.s32.totalorder %v559, 0
        %v562 = vsel %vm560, 1e-09, %v556
        %v563 = vsel %vm561, 1e-09, %v557
        %vm564 = vcmask 64512
        %v565 = vsel %vm564, %v562, -inf
        %566 = vmax.xlane.f32.xlu0 %v565
        %v567 = vpop.xlane.xlu0 %566
        %v568 = vsel %vm564, %v563, -inf
        %569 = vmax.xlane.f32.xlu0 %v568
        %v570 = vpop.xlane.xlu0 %569
        %v571 = vsub.f32 %v562, %v567
        %v572 = vsub.f32 %v563, %v570
        %v573 = vmul.f32 %v571, 1.442695
        %v574 = vpow.pop %v573
        %v575 = vmul.f32 %v572, 1.442695
        %v576 = vpow.pop %v575
        %v577 = vsel %vm564, %v574, 0.0
        %578 = vadd.xlane.f32.xlu0 %v577
        %v579 = vpop.xlane.xlu0 %578
        %v580 = vsel %vm564, %v576, 0.0
        %581 = vadd.xlane.f32.xlu0 %v580
        %v582 = vpop.xlane.xlu0 %581
        %v583 = vrcp.pop %v579
        %v584 = vmul.f32 %v574, %v583
        %v585 = vrcp.pop %v582
        %v586 = vmul.f32 %v576, %v585
        %587 = vst.msk [vmem:[%s392] sm:$0xff] %vm564, %v584
        %588 = vst.msk [vmem:[%s392 + $0x8] sm:$0xff] %vm564, %v586
        %v589 = vld [vmem:[%s337] sm:$0xff]
        %v590 = vld [vmem:[%s337 + $0x8] sm:$0xff]
        %v592 = vsel %vm564, %v584, 0
        %594 = vmatprep.subr.mxu0 0.0
        %595 = vmatpush1.msra.mxu0 0.0
        %596 = vmatprep.subr.mxu0 0.0
        %597 = vmatpush1.msra.mxu0 0.0
        %598 = vmatprep.subr.mxu0 0.0
        %599 = vmatpush1.msra.mxu0 0.0
        %600 = vmatprep.subr.mxu0 0.0
        %601 = vmatpush1.msra.mxu0 0.0
        %602 = vmatprep.subr.mxu0 0.0
        %603 = vmatpush1.msra.mxu0 0.0
        %604 = vmatprep.subr.mxu0 0.0
        %605 = vmatpush1.msra.mxu0 0.0
        %606 = vmatprep.subr.mxu0 0.0
        %607 = vmatpush1.msra.mxu0 0.0
        %608 = vmatprep.subr.mxu0 0.0
        %609 = vmatpush1.msra.mxu0 0.0
        %610 = vmatprep.subr.mxu0 0.0
        %611 = vmatpush1.msra.mxu0 0.0
        %612 = vmatprep.subr.mxu0 0.0
        %613 = vmatpush1.msra.mxu0 0.0
        %614 = vmatprep.subr.mxu0 0.0
        %615 = vmatpush1.msra.mxu0 0.0
        %616 = vmatprep.subr.mxu0 0.0
        %617 = vmatpush1.msra.mxu0 0.0
        %618 = vmatprep.subr.mxu0 0.0
        %619 = vmatpush1.msra.mxu0 0.0
        %620 = vmatprep.subr.mxu0 0.0
        %621 = vmatpush1.msra.mxu0 0.0
        %622 = vmatprep.subr.mxu0 0.0
        %623 = vmatpush1.msra.mxu0 0.0
        %624 = vmatprep.subr.mxu0 0.0
        %625 = vmatpush1.msra.mxu0 %v589
        %626 = vmatprep.subr.mxu0 0.0
        %627 = vmatpush2.msra.mxu0 0.0
        %628 = vmatprep.subr.mxu0 0.0
        %629 = vmatpush2.msra.mxu0 0.0
        %630 = vmatprep.subr.mxu0 0.0
        %631 = vmatpush2.msra.mxu0 0.0
        %632 = vmatprep.subr.mxu0 0.0
        %633 = vmatpush2.msra.mxu0 0.0
        %634 = vmatprep.subr.mxu0 0.0
        %635 = vmatpush2.msra.mxu0 0.0
        %636 = vmatprep.subr.mxu0 0.0
        %637 = vmatpush2.msra.mxu0 0.0
        %638 = vmatprep.subr.mxu0 0.0
        %639 = vmatpush2.msra.mxu0 0.0
        %640 = vmatprep.subr.mxu0 0.0
        %641 = vmatpush2.msra.mxu0 0.0
        %642 = vmatprep.subr.mxu0 0.0
        %643 = vmatpush2.msra.mxu0 0.0
        %644 = vmatprep.subr.mxu0 0.0
        %645 = vmatpush2.msra.mxu0 0.0
        %646 = vmatprep.subr.mxu0 0.0
        %647 = vmatpush2.msra.mxu0 0.0
        %648 = vmatprep.subr.mxu0 0.0
        %649 = vmatpush2.msra.mxu0 0.0
        %650 = vmatprep.subr.mxu0 0.0
        %651 = vmatpush2.msra.mxu0 0.0
        %652 = vmatprep.subr.mxu0 0.0
        %653 = vmatpush2.msra.mxu0 0.0
        %654 = vmatprep.subr.mxu0 0.0
        %655 = vmatpush2.msra.mxu0 0.0
        %656 = vmatprep.subr.mxu0 0.0
        %657 = vmatpush2.msra.mxu0 0.0
        %658 = vmatprep.mubr.f32.mxu0 0.0
        %659 = vmatmul.mubr.f32.gmra.mxu0 %v592
        %v660 = vpop.f32.mrf.mxu0
        %v661 = vadd.f32 0.0, %v660
        %v662 = vpop.f32.mrf.mxu0
        %663 = vdwg.mxu0
        %v665 = vsel %vm564, %v586, 0
        %667 = vmatprep.subr.mxu0 0.0
        %668 = vmatpush1.msra.mxu0 0.0
        %669 = vmatprep.subr.mxu0 0.0
        %670 = vmatpush1.msra.mxu0 0.0
        %671 = vmatprep.subr.mxu0 0.0
        %672 = vmatpush1.msra.mxu0 0.0
        %673 = vmatprep.subr.mxu0 0.0
        %674 = vmatpush1.msra.mxu0 0.0
        %675 = vmatprep.subr.mxu0 0.0
        %676 = vmatpush1.msra.mxu0 0.0
        %677 = vmatprep.subr.mxu0 0.0
        %678 = vmatpush1.msra.mxu0 0.0
        %679 = vmatprep.subr.mxu0 0.0
        %680 = vmatpush1.msra.mxu0 0.0
        %681 = vmatprep.subr.mxu0 0.0
        %682 = vmatpush1.msra.mxu0 0.0
        %683 = vmatprep.subr.mxu0 0.0
        %684 = vmatpush1.msra.mxu0 0.0
        %685 = vmatprep.subr.mxu0 0.0
        %686 = vmatpush1.msra.mxu0 0.0
        %687 = vmatprep.subr.mxu0 0.0
        %688 = vmatpush1.msra.mxu0 0.0
        %689 = vmatprep.subr.mxu0 0.0
        %690 = vmatpush1.msra.mxu0 0.0
        %691 = vmatprep.subr.mxu0 0.0
        %692 = vmatpush1.msra.mxu0 0.0
        %693 = vmatprep.subr.mxu0 0.0
        %694 = vmatpush1.msra.mxu0 0.0
        %695 = vmatprep.subr.mxu0 0.0
        %696 = vmatpush1.msra.mxu0 0.0
        %697 = vmatprep.subr.mxu0 0.0
        %698 = vmatpush1.msra.mxu0 %v590
        %699 = vmatprep.subr.mxu0 0.0
        %700 = vmatpush2.msra.mxu0 0.0
        %701 = vmatprep.subr.mxu0 0.0
        %702 = vmatpush2.msra.mxu0 0.0
        %703 = vmatprep.subr.mxu0 0.0
        %704 = vmatpush2.msra.mxu0 0.0
        %705 = vmatprep.subr.mxu0 0.0
        %706 = vmatpush2.msra.mxu0 0.0
        %707 = vmatprep.subr.mxu0 0.0
        %708 = vmatpush2.msra.mxu0 0.0
        %709 = vmatprep.subr.mxu0 0.0
        %710 = vmatpush2.msra.mxu0 0.0
        %711 = vmatprep.subr.mxu0 0.0
        %712 = vmatpush2.msra.mxu0 0.0
        %713 = vmatprep.subr.mxu0 0.0
        %714 = vmatpush2.msra.mxu0 0.0
        %715 = vmatprep.subr.mxu0 0.0
        %716 = vmatpush2.msra.mxu0 0.0
        %717 = vmatprep.subr.mxu0 0.0
        %718 = vmatpush2.msra.mxu0 0.0
        %719 = vmatprep.subr.mxu0 0.0
        %720 = vmatpush2.msra.mxu0 0.0
        %721 = vmatprep.subr.mxu0 0.0
        %722 = vmatpush2.msra.mxu0 0.0
        %723 = vmatprep.subr.mxu0 0.0
        %724 = vmatpush2.msra.mxu0 0.0
        %725 = vmatprep.subr.mxu0 0.0
        %726 = vmatpush2.msra.mxu0 0.0
        %727 = vmatprep.subr.mxu0 0.0
        %728 = vmatpush2.msra.mxu0 0.0
        %729 = vmatprep.subr.mxu0 0.0
        %730 = vmatpush2.msra.mxu0 0.0
        %731 = vmatprep.mubr.f32.mxu0 0.0
        %732 = vmatmul.mubr.f32.gmra.mxu0 %v665
        %v733 = vpop.f32.mrf.mxu0
        %v734 = vadd.f32 0.0, %v733
        %v735 = vpop.f32.mrf.mxu0
        %736 = vdwg.mxu0
        %737 = vst.msk [vmem:[%s385] sm:$0xff] %vm403, %v661
        %738 = vst.msk [vmem:[%s385 + $0x8] sm:$0xff] %vm403, %v734
        %s739 = sand.u32 %s162, 1
        %s740 = scalar_lea.sflag [#allocation4], %s739
        %s741 = sand.u32 %s162, 1
        %s742 = smul.addr %s741, 16
        %s743 = scalar_lea.vmem [#allocation10], %s742
        %s744 = sand.u32 %s190, 1
        %s745 = scalar_lea.sflag [#allocation12], %s744
        %s746 = sand.u32 %s190, 1
        %s747 = smul.addr %s746, 16
        %s748 = scalar_lea.vmem [#allocation11], %s747
        // Predicated region
        $region53: #{tpu_custom_call.1} parent=35 // pred_check
          %p749 = pneg %p172
        $region54: #{tpu_custom_call.1} parent=35 // pred_check_branch
          %751 = sbr.rel (%p749) target = $region56
        $region55: #{tpu_custom_call.1} parent=35 // pred_region
          %s752 = smul.u32 2, %s36
          %s754 = ssub.s32 256, 256
          %755 = vsyncadd %s740, %s754
          %s756 = sadd.s32 %s37, %s752
          %s757 = smul.addr %s756, 128
          %s758 = scalar_lea.hbm %s4, %s757
          %s759 = sshll.u32 %s743, 4
          %s760 = int_to_ptr.vmem [resolvable:$true] %s759
          %765 = dma.vmem_to_hbm [thread:$0]  %s760, 256, %s758, %s740, 128, 128, 8
        $region56: #{tpu_custom_call.1} parent=35 // pred_fallthru
          _
        // Predicated region
        $region57: #{tpu_custom_call.1} parent=35 // pred_check
          %p766 = pneg %p200
        $region58: #{tpu_custom_call.1} parent=35 // pred_check_branch
          %768 = sbr.rel (%p766) target = $region60
        $region59: #{tpu_custom_call.1} parent=35 // pred_region
          %s769 = smul.u32 2, %s36
          %s771 = ssub.s32 256, 256
          %772 = vsyncadd %s745, %s771
          %s773 = sadd.s32 %s37, %s769
          %s774 = smul.addr %s773, 128
          %s775 = scalar_lea.hbm %s5, %s774
          %s776 = sshll.u32 %s748, 4
          %s777 = int_to_ptr.vmem [resolvable:$true] %s776
          %782 = dma.vmem_to_hbm [thread:$0]  %s777, 256, %s775, %s745, 128, 128, 8
        $region60: #{tpu_custom_call.1} parent=35 // pred_fallthru
          _
      $region36: #{tpu_custom_call.1} parent=5 // pred_fallthru
        _
      %p783 = scmp.le.s32.totalorder 2, %s27
      // Predicated region
      $region61: #{tpu_custom_call.1} parent=5 // pred_check
        %p784 = pneg %p783
      $region62: #{tpu_custom_call.1} parent=5 // pred_check_branch
        %786 = sbr.rel (%p784) target = $region64
      $region63: #{tpu_custom_call.1} parent=5 // pred_region
        %s787 = ssub.s32 %s27, 2
        // Predicated region
        $region65: #{tpu_custom_call.1} parent=63 // pred_check
          %p788 = pneg %p178
        $region66: #{tpu_custom_call.1} parent=63 // pred_check_branch
          %790 = sbr.rel (%p788) target = $region68
        $region67: #{tpu_custom_call.1} parent=63 // pred_region
          %s791 = sand.u32 %s163, 1
          %s792 = scalar_lea.sflag [#allocation4], %s791
          %s793 = sand.u32 %s163, 1
          %s794 = smul.addr %s793, 16
          %s795 = scalar_lea.vmem [#allocation10], %s794
          %796 = dma.done %s792, 256
        $region68: #{tpu_custom_call.1} parent=63 // pred_fallthru
          _
        // Predicated region
        $region69: #{tpu_custom_call.1} parent=63 // pred_check
          %p797 = pneg %p206
        $region70: #{tpu_custom_call.1} parent=63 // pred_check_branch
          %799 = sbr.rel (%p797) target = $region72
        $region71: #{tpu_custom_call.1} parent=63 // pred_region
          %s800 = sand.u32 %s191, 1
          %s801 = scalar_lea.sflag [#allocation12], %s800
          %s802 = sand.u32 %s191, 1
          %s803 = smul.addr %s802, 16
          %s804 = scalar_lea.vmem [#allocation11], %s803
          %805 = dma.done %s801, 256
        $region72: #{tpu_custom_call.1} parent=63 // pred_fallthru
          _
      $region64: #{tpu_custom_call.1} parent=5 // pred_fallthru
        _
    $region6: #{tpu_custom_call.1} parent=1 // loop_footer
      %s31 = sadd.s32 1, %s27
    $region7: #{tpu_custom_call.1} parent=1 // loop_footer_branch
      %26 = sbr.rel target = $region3
    $region8: #{tpu_custom_call.1} parent=1 // loop_exit
      _
    %806 = vsyncpa [#allocation3], 1
    %s807 = scalar_lea.sflag [#allocation3], 1
    %808 = vsyncpa %s807, 1
    %809 = vsyncpa [#allocation6], 1
    %s810 = scalar_lea.sflag [#allocation6], 1
    %811 = vsyncpa %s810, 1
    %812 = vsyncpa [#allocation9], 1
    %s813 = scalar_lea.sflag [#allocation9], 1
    %814 = vsyncpa %s813, 1
    %815 = vsyncpa [#allocation4], 1
    %s816 = scalar_lea.sflag [#allocation4], 1
    %817 = vsyncpa %s816, 1
    %818 = vsyncpa [#allocation12], 1
    %s819 = scalar_lea.sflag [#allocation12], 1
    %820 = vsyncpa %s819, 1

</llo_original>
